<compile_context>
chip_gen: v7x
topology: tpu7x:2x2x1
jax: 0.10.0
libtpu: 0.0.40
codegen_flags: <defaults>
</compile_context>

<pallas_src>
import functools

import jax
import jax.numpy as jnp
from jax import lax
from jax.experimental import pallas as pl
from jax.experimental.pallas import tpu as pltpu

KERNEL = 4
STRIDE = 2
PAD = 1
BN_EPS = 1e-5
NEG_SLOPE = 0.2
LANE = 128
SUBLANE = 8
MATMUL_DTYPE = jnp.bfloat16          # MXU-native on v5e/v6e/v7x
W_RESIDENT_BYTES = 6 * 1024 * 1024   # keep weight resident in VMEM below this


def _round_up(x, m):
    return (x + m - 1) // m * m


def _vmem_limit_bytes():
    """Per-generation scoped-VMEM budget: ~112 MiB on v5e/v6e (128 MiB VMEM),
    ~48 MiB on v7x (64 MiB VMEM).  Falls back to a safe 48 MiB."""
    try:
        cap = pltpu.get_tpu_info().vmem_capacity_bytes
        return max(32 << 20, min(cap - (16 << 20), 112 << 20))
    except Exception:  # pragma: no cover - defensive fallback
        return 48 << 20


def _conv_stats_kernel(x_ref, w_ref, y_ref, sum_ref, ssq_ref, acc_ref, *,
                       tk, w_resident):
    """Phase 1: K-tiled bf16 MXU matmul into an fp32 VMEM accumulator.
    On the last K step: bf16 store of the conv result + per-(M,N)-tile partial
    BN statistics (sum, sum of squares) as two direct full-block stores."""
    k = pl.program_id(2)

    @pl.when(k == 0)
    def _():
        acc_ref[...] = jnp.zeros_like(acc_ref)

    if w_resident:
        # Full weight is resident in VMEM (constant block index, DMA'd once);
        # slice out the current K tile.
        w = w_ref[pl.ds(pl.multiple_of(k * tk, LANE), tk), :]
    else:
        w = w_ref[...]
    acc_ref[...] += jnp.dot(x_ref[...], w, preferred_element_type=jnp.float32)

    @pl.when(k == pl.num_programs(2) - 1)
    def _():
        acc = acc_ref[...]                                  # (tm, tn) fp32
        y_ref[...] = acc.astype(y_ref.dtype)                # bf16 intermediate
        sum_ref[...] = jnp.sum(acc, axis=0, keepdims=True)[None]
        ssq_ref[...] = jnp.sum(acc * acc, axis=0, keepdims=True)[None]


def _bn_act_kernel(y_ref, scale_ref, shift_ref, o_ref):
    """Phase 2: folded BN affine (fp32 per-channel scale/shift) applied to the
    bf16 conv intermediate, then LeakyReLU(0.2)."""
    y = y_ref[...].astype(jnp.float32) * scale_ref[...] + shift_ref[...]
    o_ref[...] = jnp.where(y >= 0, y, NEG_SLOPE * y).astype(o_ref.dtype)


def _im2col_3d_cl(x):
    """x: (N, C, D, H, W) -> bf16 (M, K) channels-last patch matrix.
    M = N*Do*Ho*Wo; column index = offset * C_in + c, offset = kd*16+kh*4+kw.
    Channels-last construction avoids a full (M, K)-sized transpose pass."""
    n, c, d, h, w = x.shape
    do = (d + 2 * PAD - KERNEL) // STRIDE + 1
    ho = (h + 2 * PAD - KERNEL) // STRIDE + 1
    wo = (w + 2 * PAD - KERNEL) // STRIDE + 1
    x_cl = x.astype(MATMUL_DTYPE).transpose(0, 2, 3, 4, 1)   # NDHWC (input-sized)
    xp = jnp.pad(x_cl, ((0, 0), (PAD, PAD), (PAD, PAD), (PAD, PAD), (0, 0)))
    cols = []
    for kd in range(KERNEL):
        for kh in range(KERNEL):
            for kw in range(KERNEL):
                cols.append(xp[:,
                               kd:kd + STRIDE * do:STRIDE,
                               kh:kh + STRIDE * ho:STRIDE,
                               kw:kw + STRIDE * wo:STRIDE, :])
    patches = jnp.stack(cols, axis=4)                  # (N, Do, Ho, Wo, 64, C)
    return patches.reshape(n * do * ho * wo, KERNEL ** 3 * c), (n, do, ho, wo)


@functools.partial(jax.jit, static_argnames=("tm", "tk", "channels_last"))
def downsample_conv(x, weight, bias, gamma, beta, tm=2048, tk=512,
                    channels_last=False):
    """x: (N, C_in, D, H, W) f32; weight: (C_out, C_in, 4, 4, 4) f32.
    Returns NCDHW f32 (or NDHWC if channels_last=True)."""
    del bias  # exactly cancelled by training-mode BatchNorm mean subtraction
    c_out, c_in = weight.shape[0], weight.shape[1]
    x_mat, (n, do, ho, wo) = _im2col_3d_cl(x)               # bf16 (M, K)
    m, k_dim = x_mat.shape
    vmem_limit = _vmem_limit_bytes()

    # --- tile derivation ------------------------------------------------------
    c_pad = _round_up(c_out, LANE)                 # lane-dense output columns
    if c_pad <= 512:
        tn_eff = c_pad                             # single C_out tile
    else:                                          # pre-tile C_out for v7x VMEM
        tn_eff = next(t for t in (512, 384, 256, 128) if c_pad % t == 0)
    num_n = c_pad // tn_eff

    m8 = _round_up(m, SUBLANE)
    if m8 <= tm:
        # Split small problems into >=2 M tiles so the "parallel" axis spans
        # both v7x TensorCores (no effect on single-TC v5e/v6e).
        tm_eff = _round_up(pl.cdiv(m8, 2), SUBLANE)
    else:
        tm_eff = _round_up(tm, SUBLANE)
    m_pad = _round_up(m, tm_eff)
    num_m = m_pad // tm_eff

    tk_eff = min(tk, _round_up(k_dim, LANE))       # 128-aligned K tile
    k_pad = _round_up(k_dim, tk_eff)               # zero-pad K (adds zeros)
    num_k = k_pad // tk_eff

    # --- operand prep (bf16 MXU operands; accumulation stays fp32 in-kernel) --
    x_mat = jnp.pad(x_mat, ((0, m_pad - m), (0, k_pad - k_dim)))
    # w_mat[off*C_in + c, o] = weight[o, c, kd, kh, kw]  (matches patch columns)
    w_mat = weight.astype(MATMUL_DTYPE).transpose(2, 3, 4, 1, 0).reshape(
        KERNEL ** 3 * c_in, c_out)
    w_mat = jnp.pad(w_mat, ((0, k_pad - k_dim), (0, c_pad - c_out)))
    gamma_p = jnp.pad(gamma.astype(jnp.float32), (0, c_pad - c_out))
    beta_p = jnp.pad(beta.astype(jnp.float32), (0, c_pad - c_out))

    # Keep the weight resident in VMEM when small enough (loaded once via a
    # constant block index); otherwise stream (tk, tn) tiles per K step.
    w_resident = (k_pad * tn_eff * 2) <= W_RESIDENT_BYTES
    if w_resident:
        w_spec = pl.BlockSpec((k_pad, tn_eff), lambda i, j, k: (0, j))
    else:
        w_spec = pl.BlockSpec((tk_eff, tn_eff), lambda i, j, k: (k, j))

    kernel1 = functools.partial(_conv_stats_kernel, tk=tk_eff,
                                w_resident=w_resident)

    # --- phase 1: conv matmul (bf16 in / fp32 acc) + partial BN stats ---------
    conv_out, sums, sumsq = pl.pallas_call(
        kernel1,
        out_shape=(jax.ShapeDtypeStruct((m_pad, c_pad), MATMUL_DTYPE),
                   jax.ShapeDtypeStruct((num_m, 1, c_pad), jnp.float32),
                   jax.ShapeDtypeStruct((num_m, 1, c_pad), jnp.float32)),
        grid_spec=pltpu.PrefetchScalarGridSpec(
            num_scalar_prefetch=0,
            grid=(num_m, num_n, num_k),            # K (reduction) is last
            in_specs=[
                # TODO(synk): pipeline_mode=pl.Buffered(3) here would deepen
                # prefetch on v5e/v6e's 128 MiB VMEM; left at the default depth.
                pl.BlockSpec((tm_eff, tk_eff), lambda i, j, k: (i, k)),
                w_spec,
            ],
            out_specs=[
                pl.BlockSpec((tm_eff, tn_eff), lambda i, j, k: (i, j)),
                pl.BlockSpec((1, 1, tn_eff), lambda i, j, k: (i, 0, j)),
                pl.BlockSpec((1, 1, tn_eff), lambda i, j, k: (i, 0, j)),
            ],
            scratch_shapes=[pltpu.VMEM((tm_eff, tn_eff), jnp.float32)],
        ),
        compiler_params=pltpu.CompilerParams(
            dimension_semantics=("parallel", "parallel", "arbitrary"),
            vmem_limit_bytes=vmem_limit),
    )(x_mat, w_mat)

    # --- fold statistics into per-channel scale / shift (tiny, wrapper-side) --
    total_sum = jnp.sum(sums, axis=(0, 1))          # (c_pad,)
    total_ssq = jnp.sum(sumsq, axis=(0, 1))
    inv_m = 1.0 / float(m)                          # true (unpadded) row count
    mean = total_sum * inv_m
    # TODO(synk): E[y^2]-E[y]^2 in fp32 cancels badly if |mean| >> std; fine for
    # roughly zero-mean conv outputs, revisit if inputs carry large offsets.
    var = total_ssq * inv_m - mean * mean           # biased (training-mode BN)
    inv_std = lax.rsqrt(var + BN_EPS)
    scale = (gamma_p * inv_std).reshape(1, c_pad)
    shift = (beta_p - mean * gamma_p * inv_std).reshape(1, c_pad)

    # --- phase 2: normalize + LeakyReLU (mem-bound; bigger M block) -----------
    row_bytes = 12 * c_pad                          # bf16 in + f32 out, 2 bufs
    target = max(tm_eff, min(4096, (16 << 20) // row_bytes))
    mult = max(1, min(target // tm_eff, num_m if num_m < 2 else num_m // 2))
    while num_m % mult:
        mult -= 1
    tm2 = tm_eff * mult
    num_m2 = m_pad // tm2

    out_mat = pl.pallas_call(
        _bn_act_kernel,
        out_shape=jax.ShapeDtypeStruct((m_pad, c_pad), jnp.float32),
        grid_spec=pltpu.PrefetchScalarGridSpec(
            num_scalar_prefetch=0,
            grid=(num_m2,),
            in_specs=[
                pl.BlockSpec((tm2, c_pad), lambda i: (i, 0)),
                pl.BlockSpec((1, c_pad), lambda i: (0, 0)),
                pl.BlockSpec((1, c_pad), lambda i: (0, 0)),
            ],
            out_specs=pl.BlockSpec((tm2, c_pad), lambda i: (i, 0)),
        ),
        compiler_params=pltpu.CompilerParams(
            dimension_semantics=("parallel",),
            vmem_limit_bytes=vmem_limit),
    )(conv_out, scale, shift)

    # (M_pad, C_pad) -> strip padding -> (N, Do, Ho, Wo, C_out)
    out = out_mat[:m, :c_out].reshape(n, do, ho, wo, c_out)
    if channels_last:
        return out          # NDHWC: skips one full-output HBM roundtrip
    # NCDHW to match the PyTorch module (extra output transpose done by XLA).
    return out.transpose(0, 4, 1, 2, 3)


def _reference(x, weight, bias, gamma, beta):
    """Pure-JAX reference for Conv3d -> BatchNorm3d(train) -> LeakyReLU(0.2).
    Conv operands are cast to bf16 to match the kernel's MXU operand precision
    (accumulation in fp32); everything else is fp32."""
    y = lax.conv_general_dilated(
        x.astype(jnp.bfloat16), weight.astype(jnp.bfloat16),
        window_strides=(STRIDE,) * 3, padding=((PAD, PAD),) * 3,
        dimension_numbers=("NCDHW", "OIDHW", "NCDHW"),
        preferred_element_type=jnp.float32)
    y = y + bias[None, :, None, None, None]
    mean = jnp.mean(y, axis=(0, 2, 3, 4), keepdims=True)
    var = jnp.mean((y - mean) ** 2, axis=(0, 2, 3, 4), keepdims=True)
    y = (y - mean) * lax.rsqrt(var + BN_EPS)
    y = y * gamma[None, :, None, None, None] + beta[None, :, None, None, None]
    return jnp.where(y >= 0, y, NEG_SLOPE * y)


if __name__ == "__main__":
    key = jax.random.PRNGKey(0)
    k_x, k_w, k_b, k_g, k_be = jax.random.split(key, 5)

    N, C_IN, C_OUT = 2, 4, 8
    D = H = W = 8  # output spatial = 4

    x = jax.random.normal(k_x, (N, C_IN, D, H, W), dtype=jnp.float32)
    fan_in = C_IN * KERNEL ** 3
    bound = 1.0 / jnp.sqrt(fan_in)
    weight = jax.random.uniform(k_w, (C_OUT, C_IN, KERNEL, KERNEL, KERNEL),
                                minval=-bound, maxval=bound,
                                dtype=jnp.float32)
    bias = jax.random.uniform(k_b, (C_OUT,), minval=-bound, maxval=bound,
                              dtype=jnp.float32)
    gamma = jnp.ones((C_OUT,), jnp.float32)    # PyTorch BatchNorm default init
    beta = jnp.zeros((C_OUT,), jnp.float32)

    out = downsample_conv(x, weight, bias, gamma, beta)
    out = jax.block_until_ready(out)

    ref = jax.block_until_ready(_reference(x, weight, bias, gamma, beta))
    assert out.shape == (N, C_OUT, D // 2, H // 2, W // 2), out.shape
    # bf16 matmul operands + bf16 conv intermediate -> looser tolerance.
    max_err = float(jnp.max(jnp.abs(out - ref)))
    assert jnp.allclose(out, ref, atol=2e-2, rtol=2e-2), max_err

    print("KERNEL_OK")
</pallas_src>

<mosaic_0001>
module attributes {stable_mosaic.version = 11 : i64} {
  func.func @_conv_stats_kernel(%arg0: i32, %arg1: i32, %arg2: i32, %arg3: memref<64x256xbf16, #tpu.memory_space<vmem>>, %arg4: memref<256x128xbf16, #tpu.memory_space<vmem>>, %arg5: memref<64x128xbf16, #tpu.memory_space<vmem>>, %arg6: memref<1x1x128xf32, #tpu.memory_space<vmem>>, %arg7: memref<1x1x128xf32, #tpu.memory_space<vmem>>, %arg8: memref<64x128xf32, #tpu.memory_space<vmem>>) attributes {dimension_semantics = [#tpu.dimension_semantics<parallel>, #tpu.dimension_semantics<parallel>, #tpu.dimension_semantics<arbitrary>], iteration_bounds = array<i64: 2, 1, 1>, scalar_prefetch = 0 : i64, scratch_operands = 1 : i64, tpu.core_type = #tpu.core_type<tc>, window_params = [{transform_indices = @transform_0, window_bounds = array<i64: 64, 256>}, {transform_indices = @transform_1, window_bounds = array<i64: 256, 128>}, {transform_indices = @transform_2, window_bounds = array<i64: 64, 128>}, {transform_indices = @transform_3, window_bounds = array<i64: 1, 1, 128>}, {transform_indices = @transform_4, window_bounds = array<i64: 1, 1, 128>}]} {
    %c0_i32 = arith.constant 0 : i32
    %0 = arith.cmpi eq, %arg2, %c0_i32 : i32
    %1 = arith.extui %0 : i1 to i32
    %c0_i32_0 = arith.constant 0 : i32
    %2 = arith.cmpi ne, %1, %c0_i32_0 : i32
    scf.if %2 {
      %cst_9 = arith.constant 0.000000e+00 : f32
      %15 = vector.broadcast %cst_9 : f32 to vector<64x128xf32>
      %c0_10 = arith.constant 0 : index
      %c0_11 = arith.constant 0 : index
      %16 = vector.load %arg8[%c0_10, %c0_11] : memref<64x128xf32, #tpu.memory_space<vmem>>, vector<64x128xf32>
      tpu.vector_store %arg8[%c0_10, %c0_11], %15 {strides = array<i32>} : memref<64x128xf32, #tpu.memory_space<vmem>>, vector<64x128xf32>,
    } else {
    }
    %c256_i32 = arith.constant 256 : i32
    %3 = arith.muli %arg2, %c256_i32 : i32
    %4 = tpu.assume_multiple %3, 128 : i32
    %5 = arith.index_cast %4 : i32 to index
    %c0 = arith.constant 0 : index
    %6 = vector.load %arg4[%5, %c0] : memref<256x128xbf16, #tpu.memory_space<vmem>>, vector<256x128xbf16>
    %c0_1 = arith.constant 0 : index
    %c0_2 = arith.constant 0 : index
    %7 = vector.load %arg8[%c0_1, %c0_2] : memref<64x128xf32, #tpu.memory_space<vmem>>, vector<64x128xf32>
    %c0_3 = arith.constant 0 : index
    %c0_4 = arith.constant 0 : index
    %8 = vector.load %arg3[%c0_3, %c0_4] : memref<64x256xbf16, #tpu.memory_space<vmem>>, vector<64x256xbf16>
    %cst = arith.constant dense<0.000000e+00> : vector<64x128xf32>
    %9 = tpu.matmul %8, %6, %cst {dimension_numbers = #tpu.dot_dimension_numbers<[1], [0], [0], [1], [0, 0, 1, 1], [], []>} : vector<64x256xbf16>, vector<256x128xbf16>, vector<64x128xf32> -> vector<64x128xf32>
    %10 = arith.addf %7, %9 : vector<64x128xf32>
    %c0_5 = arith.constant 0 : index
    %c0_6 = arith.constant 0 : index
    %11 = vector.load %arg8[%c0_5, %c0_6] : memref<64x128xf32, #tpu.memory_space<vmem>>, vector<64x128xf32>
    tpu.vector_store %arg8[%c0_5, %c0_6], %10 {strides = array<i32>} : memref<64x128xf32, #tpu.memory_space<vmem>>, vector<64x128xf32>,
    %c0_i32_7 = arith.constant 0 : i32
    %12 = arith.cmpi eq, %arg2, %c0_i32_7 : i32
    %13 = arith.extui %12 : i1 to i32
    %c0_i32_8 = arith.constant 0 : i32
    %14 = arith.cmpi ne, %13, %c0_i32_8 : i32
    scf.if %14 {
      %c0_9 = arith.constant 0 : index
      %c0_10 = arith.constant 0 : index
      %15 = vector.load %arg8[%c0_9, %c0_10] : memref<64x128xf32, #tpu.memory_space<vmem>>, vector<64x128xf32>
      %16 = arith.truncf %15 : vector<64x128xf32> to vector<64x128xbf16>
      %c0_11 = arith.constant 0 : index
      %c0_12 = arith.constant 0 : index
      %17 = vector.load %arg5[%c0_11, %c0_12] : memref<64x128xbf16, #tpu.memory_space<vmem>>, vector<64x128xbf16>
      tpu.vector_store %arg5[%c0_11, %c0_12], %16 {strides = array<i32>} : memref<64x128xbf16, #tpu.memory_space<vmem>>, vector<64x128xbf16>,
      %cst_13 = arith.constant dense<0.000000e+00> : vector<128xf32>
      %18 = vector.multi_reduction <add>, %15, %cst_13 [0] : vector<64x128xf32> to vector<128xf32>
      %19 = vector.shape_cast %18 : vector<128xf32> to vector<1x128xf32>
      %20 = vector.shape_cast %19 : vector<1x128xf32> to vector<1x1x128xf32>
      %c0_14 = arith.constant 0 : index
      %c0_15 = arith.constant 0 : index
      %c0_16 = arith.constant 0 : index
      %21 = vector.load %arg6[%c0_14, %c0_15, %c0_16] : memref<1x1x128xf32, #tpu.memory_space<vmem>>, vector<1x1x128xf32>
      tpu.vector_store %arg6[%c0_14, %c0_15, %c0_16], %20 {strides = array<i32>} : memref<1x1x128xf32, #tpu.memory_space<vmem>>, vector<1x1x128xf32>,
      %22 = arith.mulf %15, %15 : vector<64x128xf32>
      %cst_17 = arith.constant dense<0.000000e+00> : vector<128xf32>
      %23 = vector.multi_reduction <add>, %22, %cst_17 [0] : vector<64x128xf32> to vector<128xf32>
      %24 = vector.shape_cast %23 : vector<128xf32> to vector<1x128xf32>
      %25 = vector.shape_cast %24 : vector<1x128xf32> to vector<1x1x128xf32>
      %c0_18 = arith.constant 0 : index
      %c0_19 = arith.constant 0 : index
      %c0_20 = arith.constant 0 : index
      %26 = vector.load %arg7[%c0_18, %c0_19, %c0_20] : memref<1x1x128xf32, #tpu.memory_space<vmem>>, vector<1x1x128xf32>
      tpu.vector_store %arg7[%c0_18, %c0_19, %c0_20], %25 {strides = array<i32>} : memref<1x1x128xf32, #tpu.memory_space<vmem>>, vector<1x1x128xf32>,
    } else {
    }
    return
  }
  func.func @transform_0(%arg0: i32, %arg1: i32, %arg2: i32) -> (i32, i32) {
    %c0_i32 = arith.constant 0 : i32
    return %arg0, %arg2 : i32, i32
  }
  func.func @transform_1(%arg0: i32, %arg1: i32, %arg2: i32) -> (i32, i32) {
    %c0_i32 = arith.constant 0 : i32
    %c0_i32_0 = arith.constant 0 : i32
    return %c0_i32, %arg1 : i32, i32
  }
  func.func @transform_2(%arg0: i32, %arg1: i32, %arg2: i32) -> (i32, i32) {
    %c0_i32 = arith.constant 0 : i32
    return %arg0, %arg1 : i32, i32
  }
  func.func @transform_3(%arg0: i32, %arg1: i32, %arg2: i32) -> (i32, i32, i32) {
    %c0_i32 = arith.constant 0 : i32
    %c0_i32_0 = arith.constant 0 : i32
    return %arg0, %c0_i32, %arg1 : i32, i32, i32
  }
  func.func @transform_4(%arg0: i32, %arg1: i32, %arg2: i32) -> (i32, i32, i32) {
    %c0_i32 = arith.constant 0 : i32
    %c0_i32_0 = arith.constant 0 : i32
    return %arg0, %c0_i32, %arg1 : i32, i32, i32
  }
}

module attributes {stable_mosaic.version = 11 : i64} {
  func.func @_bn_act_kernel(%arg0: i32, %arg1: memref<64x128xbf16, #tpu.memory_space<vmem>>, %arg2: memref<1x128xf32, #tpu.memory_space<vmem>>, %arg3: memref<1x128xf32, #tpu.memory_space<vmem>>, %arg4: memref<64x128xf32, #tpu.memory_space<vmem>>) attributes {dimension_semantics = [#tpu.dimension_semantics<parallel>], iteration_bounds = array<i64: 2>, scalar_prefetch = 0 : i64, scratch_operands = 0 : i64, tpu.core_type = #tpu.core_type<tc>, window_params = [{transform_indices = @transform_0, window_bounds = array<i64: 64, 128>}, {pipeline_mode = #tpu.pipeline_mode<synchronous>, transform_indices = @transform_1, window_bounds = array<i64: 1, 128>}, {pipeline_mode = #tpu.pipeline_mode<synchronous>, transform_indices = @transform_2, window_bounds = array<i64: 1, 128>}, {transform_indices = @transform_3, window_bounds = array<i64: 64, 128>}]} {
    %c0 = arith.constant 0 : index
    %c0_0 = arith.constant 0 : index
    %0 = vector.load %arg1[%c0, %c0_0] : memref<64x128xbf16, #tpu.memory_space<vmem>>, vector<64x128xbf16>
    %1 = arith.extf %0 : vector<64x128xbf16> to vector<64x128xf32>
    %c0_1 = arith.constant 0 : index
    %c0_2 = arith.constant 0 : index
    %2 = vector.load %arg2[%c0_1, %c0_2] : memref<1x128xf32, #tpu.memory_space<vmem>>, vector<1x128xf32>
    %3 = vector.broadcast %2 : vector<1x128xf32> to vector<64x128xf32>
    %4 = arith.mulf %1, %3 : vector<64x128xf32>
    %c0_3 = arith.constant 0 : index
    %c0_4 = arith.constant 0 : index
    %5 = vector.load %arg3[%c0_3, %c0_4] : memref<1x128xf32, #tpu.memory_space<vmem>>, vector<1x128xf32>
    %6 = vector.broadcast %5 : vector<1x128xf32> to vector<64x128xf32>
    %7 = arith.addf %4, %6 : vector<64x128xf32>
    %cst = arith.constant 0.000000e+00 : f32
    %8 = vector.broadcast %cst : f32 to vector<64x128xf32>
    %9 = arith.cmpf oge, %7, %8 : vector<64x128xf32>
    %cst_5 = arith.constant 2.000000e-01 : f32
    %10 = vector.broadcast %cst_5 : f32 to vector<64x128xf32>
    %11 = arith.mulf %10, %7 : vector<64x128xf32>
    %12 = arith.select %9, %7, %11 : vector<64x128xi1>, vector<64x128xf32>
    %c0_6 = arith.constant 0 : index
    %c0_7 = arith.constant 0 : index
    %13 = vector.load %arg4[%c0_6, %c0_7] : memref<64x128xf32, #tpu.memory_space<vmem>>, vector<64x128xf32>
    tpu.vector_store %arg4[%c0_6, %c0_7], %12 {strides = array<i32>} : memref<64x128xf32, #tpu.memory_space<vmem>>, vector<64x128xf32>,
    return
  }
  func.func @transform_0(%arg0: i32) -> (i32, i32) {
    %c0_i32 = arith.constant 0 : i32
    %c0_i32_0 = arith.constant 0 : i32
    return %arg0, %c0_i32 : i32, i32
  }
  func.func @transform_1(%arg0: i32) -> (i32, i32) {
    %c0_i32 = arith.constant 0 : i32
    %c0_i32_0 = arith.constant 0 : i32
    %c0_i32_1 = arith.constant 0 : i32
    return %c0_i32, %c0_i32_0 : i32, i32
  }
  func.func @transform_2(%arg0: i32) -> (i32, i32) {
    %c0_i32 = arith.constant 0 : i32
    %c0_i32_0 = arith.constant 0 : i32
    %c0_i32_1 = arith.constant 0 : i32
    return %c0_i32, %c0_i32_0 : i32, i32
  }
  func.func @transform_3(%arg0: i32) -> (i32, i32) {
    %c0_i32 = arith.constant 0 : i32
    %c0_i32_0 = arith.constant 0 : i32
    return %arg0, %c0_i32 : i32, i32
  }
}

</mosaic_0001>

<llo_original>
// kernel: downsample_conv.3
$region0: #{downsample_conv.3}
  #allocation0 [shape = 'u32[]', space=smem, size = 0x4, offset = 0x4, fixed_abs, tag = 'smem constant byte address 0x4 - core index']
  #allocation1 [shape = 'u32[144,128]{1,0:T(1,128)}', space=vmem, size = 0x12000, scoped, tag = 'internal scratch']
  %s0 = inlined_call_operand.vmem [shape: bf16[128,128], index: 0, kind: input, shape index: {}]
  %s1 = inlined_call_operand.vmem [shape: f32[1,128], index: 1, kind: input, shape index: {}]
  %s2 = inlined_call_operand.vmem [shape: f32[1,128], index: 2, kind: input, shape index: {}]
  %s3 = inlined_call_operand.hbm [shape: f32[128,128], index: 3, kind: output, shape index: {}]
  %s4 = sld [smem:[#allocation0]]
  $region45: #{downsample_conv.3} parent=0
    _
  %s6 = ssub.s32 1, %s4
  %s7 = scalar_select 0, %s6, %s4
  $region1: #{downsample_conv.3} parent=0
    #allocation2 [shape = 'u8[65536]{0}', space=vmem, size = 0x10000, scoped, tag = 'output window, operand 0']
    #allocation3 [shape = 's32[2]{0}', space=sflag, size = 0x8, scoped, tag = 'scoped memory for downsample_conv.3']
    %8 = vsyncpa [#allocation3], 0
    %s9 = scalar_lea.sflag [#allocation3], 1
    %10 = vsyncpa %s9, 0
    loop: start=0, step=1, limit=4
    $region2: #{downsample_conv.3} parent=1 // loop_pre_header
      _
    $region3: #{downsample_conv.3} parent=1 // loop_header
      %s12 = sphi 0, %s16
      %p13 = scmp.ge.s32.totalorder %s12, 4
      %s22 = sphi 0, %s24
      %s25 = sphi 0, %s22
      %s26 = sphi 0, %s25
      %s42 = sphi 0, %s26
      %s46 = sphi 0, %s46
      %s48 = sphi 0, %s46
      %s49 = sphi 0, %s48
      %s63 = sphi 0, %s49
      %s67 = sphi 0, %s67
      %s69 = sphi 0, %s67
      %s70 = sphi 0, %s69
      %s84 = sphi 0, %s70
      %s90 = sphi 0, %s92
      %s93 = sphi 0, %s90
      %s94 = sphi 0, %s93
      %s110 = sphi 0, %s94
    $region4: #{downsample_conv.3} parent=1 // loop_header_branch
      %15 = sbr.rel (%p13) target = $region8
    $region5: #{downsample_conv.3} parent=1 // loop_body
      %s17 = ssub.s32 %s12, 1
      %s18 = ssub.s32 %s12, 2
      %s19 = sadd.s32 %s12, 1
      %s20 = ssub.s32 %s12, %s19
      %p21 = scmp.eq.s32.totalorder %s20, 0
      %s23 = sadd.s32 %s22, 1
      %s24 = scalar_select %p21, %s22, %s23
      %p27 = pneg %p21
      %p28 = scmp.eq.s32.totalorder %s12, 1
      %p29 = por %p27, %p28
      %p30 = scmp.ne.s32.totalorder %s22, %s25
      %p31 = scmp.eq.s32.totalorder %s12, 0
      %p32 = por %p30, %p31
      %p33 = scmp.ne.s32.totalorder %s22, %s25
      %p34 = scmp.eq.s32.totalorder %s17, 1
      %p35 = por %p33, %p34
      %p36 = scmp.ne.s32.totalorder %s25, %s26
      %p37 = scmp.eq.s32.totalorder %s17, 0
      %p38 = por %p36, %p37
      %p39 = scmp.ne.s32.totalorder %s25, %s26
      %p40 = scmp.eq.s32.totalorder %s18, 1
      %p41 = por %p39, %p40
      %p43 = scmp.ne.s32.totalorder %s26, %s42
      %p44 = scmp.eq.s32.totalorder %s18, 0
      %p45 = por %p43, %p44
      %s47 = sadd.s32 %s46, 1
      %p50 = scmp.eq.s32.totalorder %s12, 1
      %p51 = scmp.ne.s32.totalorder %s46, %s48
      %p52 = scmp.eq.s32.totalorder %s12, 0
      %p53 = por %p51, %p52
      %p54 = scmp.ne.s32.totalorder %s46, %s48
      %p55 = scmp.eq.s32.totalorder %s17, 1
      %p56 = por %p54, %p55
      %p57 = scmp.ne.s32.totalorder %s48, %s49
      %p58 = scmp.eq.s32.totalorder %s17, 0
      %p59 = por %p57, %p58
      %p60 = scmp.ne.s32.totalorder %s48, %s49
      %p61 = scmp.eq.s32.totalorder %s18, 1
      %p62 = por %p60, %p61
      %p64 = scmp.ne.s32.totalorder %s49, %s63
      %p65 = scmp.eq.s32.totalorder %s18, 0
      %p66 = por %p64, %p65
      %s68 = sadd.s32 %s67, 1
      %p71 = scmp.eq.s32.totalorder %s12, 1
      %p72 = scmp.ne.s32.totalorder %s67, %s69
      %p73 = scmp.eq.s32.totalorder %s12, 0
      %p74 = por %p72, %p73
      %p75 = scmp.ne.s32.totalorder %s67, %s69
      %p76 = scmp.eq.s32.totalorder %s17, 1
      %p77 = por %p75, %p76
      %p78 = scmp.ne.s32.totalorder %s69, %s70
      %p79 = scmp.eq.s32.totalorder %s17, 0
      %p80 = por %p78, %p79
      %p81 = scmp.ne.s32.totalorder %s69, %s70
      %p82 = scmp.eq.s32.totalorder %s18, 1
      %p83 = por %p81, %p82
      %p85 = scmp.ne.s32.totalorder %s70, %s84
      %p86 = scmp.eq.s32.totalorder %s18, 0
      %p87 = por %p85, %p86
      %s88 = ssub.s32 %s12, %s19
      %p89 = scmp.eq.s32.totalorder %s88, 0
      %s91 = sadd.s32 %s90, 1
      %s92 = scalar_select %p89, %s90, %s91
      %p95 = pneg %p89
      %p96 = scmp.eq.s32.totalorder %s12, 1
      %p97 = por %p95, %p96
      %p98 = scmp.ne.s32.totalorder %s90, %s93
      %p99 = scmp.eq.s32.totalorder %s12, 0
      %p100 = por %p98, %p99
      %p101 = scmp.ne.s32.totalorder %s90, %s93
      %p102 = scmp.eq.s32.totalorder %s17, 1
      %p103 = por %p101, %p102
      %p104 = scmp.ne.s32.totalorder %s93, %s94
      %p105 = scmp.eq.s32.totalorder %s17, 0
      %p106 = por %p104, %p105
      %p107 = scmp.ne.s32.totalorder %s93, %s94
      %p108 = scmp.eq.s32.totalorder %s18, 1
      %p109 = por %p107, %p108
      %p111 = scmp.ne.s32.totalorder %s94, %s110
      %p112 = scmp.eq.s32.totalorder %s18, 0
      %p113 = por %p111, %p112
      %p114 = scmp.le.s32.totalorder 1, %s12
      %p115 = scmp.lt.s32.totalorder %s12, 3
      %p116 = pnand %p114, %p115
      %p117 = pneg %p116
      // Predicated region
      $region9: #{downsample_conv.3} parent=5 // pred_check
        _
      $region10: #{downsample_conv.3} parent=5 // pred_check_branch
        %119 = sbr.rel (%p116) target = $region12
      $region11: #{downsample_conv.3} parent=5 // pred_region
        %s120 = ssub.s32 %s12, 1
        // Predicated region
        $region13: #{downsample_conv.3} parent=11 // pred_check
          %p121 = pneg %p59
        $region14: #{downsample_conv.3} parent=11 // pred_check_branch
          %123 = sbr.rel (%p121) target = $region16
        $region15: #{downsample_conv.3} parent=11 // pred_region
          _
        $region16: #{downsample_conv.3} parent=11 // pred_fallthru
          _
        // Predicated region
        $region17: #{downsample_conv.3} parent=11 // pred_check
          %p124 = pneg %p80
        $region18: #{downsample_conv.3} parent=11 // pred_check_branch
          %126 = sbr.rel (%p124) target = $region20
        $region19: #{downsample_conv.3} parent=11 // pred_region
          _
        $region20: #{downsample_conv.3} parent=11 // pred_fallthru
          _
      $region12: #{downsample_conv.3} parent=5 // pred_fallthru
        _
      %p127 = scmp.lt.s32.totalorder %s12, 2
      // Predicated region
      $region21: #{downsample_conv.3} parent=5 // pred_check
        %p128 = pneg %p127
      $region22: #{downsample_conv.3} parent=5 // pred_check_branch
        %130 = sbr.rel (%p128) target = $region24
      $region23: #{downsample_conv.3} parent=5 // pred_region
        // Predicated region
        $region25: #{downsample_conv.3} parent=23 // pred_check
          %p131 = pneg %p32
        $region26: #{downsample_conv.3} parent=23 // pred_check_branch
          %133 = sbr.rel (%p131) target = $region28
        $region27: #{downsample_conv.3} parent=23 // pred_region
          %s134 = smul.u32 8, %s12
          %p135 = scmp.lt.s32.totalorder %s134, 15
          %s136 = scalar_select %p135, %s134, 15
          %s137 = smul.addr %s136, 4
          %s138 = scalar_lea.vmem %s0, %s137
          %s139 = smul.u32 8, %s12
        $region28: #{downsample_conv.3} parent=23 // pred_fallthru
          _
      $region24: #{downsample_conv.3} parent=5 // pred_fallthru
        _
      %p140 = scmp.le.s32.totalorder 1, %s12
      %p141 = scmp.lt.s32.totalorder %s12, 3
      %p142 = pnand %p140, %p141
      %p143 = pneg %p142
      // Predicated region
      $region29: #{downsample_conv.3} parent=5 // pred_check
        _
      $region30: #{downsample_conv.3} parent=5 // pred_check_branch
        %145 = sbr.rel (%p142) target = $region32
      $region31: #{downsample_conv.3} parent=5 // pred_region
        %s146 = ssub.s32 %s12, 1
        %s147 = smul.u32 8, %s17
        %p148 = scmp.lt.s32.totalorder %s147, 15
        %s149 = scalar_select %p148, %s147, 15
        %s150 = smul.addr %s149, 4
        %s151 = scalar_lea.vmem %s0, %s150
        %p152 = pneg %p38
        %p153 = pneg %p35
        %p154 = pneg %p59
        %p155 = pneg %p56
        %p156 = pneg %p80
        %p157 = pneg %p77
        %p158 = pneg %p106
        %p159 = pneg %p103
        %s160 = sand.u32 %s93, 1
        %s161 = scalar_lea.sflag [#allocation3], %s160
        %s162 = sand.u32 %s93, 1
        %s163 = smul.addr %s162, 64
        %s164 = scalar_lea.vmem [#allocation2], %s163
        %s165 = smul.u32 8, %s17
        %p166 = scmp.lt.s32.totalorder %s165, 15
        %s167 = scalar_select %p166, %s165, 15
        %s168 = smul.addr %s167, 4
        %s169 = scalar_lea.vmem %s0, %s168
        %s170 = smul.u32 8, %s17
        %s171 = smul.u32 8, %s17
        %v172 = vld [vmem:[%s169] sm:$0xf]
        %v173 = vld [vmem:[%s169 + $0x4] sm:$0xf]
        %v174 = vld [vmem:[%s169 + $0x8] sm:$0xf]
        %v175 = vld [vmem:[%s169 + $0xc] sm:$0xf]
        %v176 = vld [vmem:[%s169 + $0x10] sm:$0xf]
        %v177 = vld [vmem:[%s169 + $0x14] sm:$0xf]
        %v178 = vld [vmem:[%s169 + $0x18] sm:$0xf]
        %v179 = vld [vmem:[%s169 + $0x1c] sm:$0xf]
        %v180 = vunpack.c.l.bf16 %v172
        %v181 = vunpack.c.l.bf16 %v173
        %v182 = vunpack.c.l.bf16 %v174
        %v183 = vunpack.c.l.bf16 %v175
        %v184 = vunpack.c.l.bf16 %v176
        %v185 = vunpack.c.l.bf16 %v177
        %v186 = vunpack.c.l.bf16 %v178
        %v187 = vunpack.c.l.bf16 %v179
        %v188 = vld [vmem:[%s1] sm:$0x1]
        %v190 = vlaneseq
        %v191 = vshrl.u32 %v190, 7
        %v192 = vsub.s32 0, %v191
        %v193 = vrot.slane %v188, %v192
        %v195 = vmul.f32 %v180, %v193
        %v196 = vmul.f32 %v181, %v193
        %v197 = vmul.f32 %v182, %v193
        %v198 = vmul.f32 %v183, %v193
        %v199 = vmul.f32 %v184, %v193
        %v200 = vmul.f32 %v185, %v193
        %v201 = vmul.f32 %v186, %v193
        %v202 = vmul.f32 %v187, %v193
        %v203 = vld [vmem:[%s2] sm:$0x1]
        %v205 = vlaneseq
        %v206 = vshrl.u32 %v205, 7
        %v207 = vsub.s32 0, %v206
        %v208 = vrot.slane %v203, %v207
        %v210 = vadd.f32 %v195, %v208
        %v211 = vadd.f32 %v196, %v208
        %v212 = vadd.f32 %v197, %v208
        %v213 = vadd.f32 %v198, %v208
        %v214 = vadd.f32 %v199, %v208
        %v215 = vadd.f32 %v200, %v208
        %v216 = vadd.f32 %v201, %v208
        %v217 = vadd.f32 %v202, %v208
        %vm218 = vcmp.ge.f32.partialorder %v210, 0.0
        %vm219 = vcmp.ge.f32.partialorder %v211, 0.0
        %vm220 = vcmp.ge.f32.partialorder %v212, 0.0
        %vm221 = vcmp.ge.f32.partialorder %v213, 0.0
        %vm222 = vcmp.ge.f32.partialorder %v214, 0.0
        %vm223 = vcmp.ge.f32.partialorder %v215, 0.0
        %vm224 = vcmp.ge.f32.partialorder %v216, 0.0
        %vm225 = vcmp.ge.f32.partialorder %v217, 0.0
        %v226 = vmul.f32 %v210, 0.2
        %v227 = vmul.f32 %v211, 0.2
        %v228 = vmul.f32 %v212, 0.2
        %v229 = vmul.f32 %v213, 0.2
        %v230 = vmul.f32 %v214, 0.2
        %v231 = vmul.f32 %v215, 0.2
        %v232 = vmul.f32 %v216, 0.2
        %v233 = vmul.f32 %v217, 0.2
        %v234 = vsel %vm218, %v210, %v226
        %v235 = vsel %vm219, %v211, %v227
        %v236 = vsel %vm220, %v212, %v228
        %v237 = vsel %vm221, %v213, %v229
        %v238 = vsel %vm222, %v214, %v230
        %v239 = vsel %vm223, %v215, %v231
        %v240 = vsel %vm224, %v216, %v232
        %v241 = vsel %vm225, %v217, %v233
        %242 = vst [vmem:[%s164] sm:$0xff] %v234
        %243 = vst [vmem:[%s164 + $0x8] sm:$0xff] %v235
        %244 = vst [vmem:[%s164 + $0x10] sm:$0xff] %v236
        %245 = vst [vmem:[%s164 + $0x18] sm:$0xff] %v237
        %246 = vst [vmem:[%s164 + $0x20] sm:$0xff] %v238
        %247 = vst [vmem:[%s164 + $0x28] sm:$0xff] %v239
        %248 = vst [vmem:[%s164 + $0x30] sm:$0xff] %v240
        %249 = vst [vmem:[%s164 + $0x38] sm:$0xff] %v241
        %s250 = sand.u32 %s93, 1
        %s251 = scalar_lea.sflag [#allocation3], %s250
        %s252 = sand.u32 %s93, 1
        %s253 = smul.addr %s252, 64
        %s254 = scalar_lea.vmem [#allocation2], %s253
        // Predicated region
        $region33: #{downsample_conv.3} parent=31 // pred_check
          %p255 = pneg %p103
        $region34: #{downsample_conv.3} parent=31 // pred_check_branch
          %257 = sbr.rel (%p255) target = $region36
        $region35: #{downsample_conv.3} parent=31 // pred_region
          %s258 = smul.u32 8, %s17
          %s260 = ssub.s32 1024, 1024
          %261 = vsyncadd %s251, %s260
          %s262 = smul.addr %s258, 128
          %s263 = scalar_lea.hbm %s3, %s262
          %s264 = sshll.u32 %s254, 4
          %s265 = int_to_ptr.vmem [resolvable:$true] %s264
          %270 = dma.vmem_to_hbm [thread:$0]  %s265, 1024, %s263, %s251, 128, 128, 8
        $region36: #{downsample_conv.3} parent=31 // pred_fallthru
          _
      $region32: #{downsample_conv.3} parent=5 // pred_fallthru
        _
      %p271 = scmp.le.s32.totalorder 2, %s12
      // Predicated region
      $region37: #{downsample_conv.3} parent=5 // pred_check
        %p272 = pneg %p271
      $region38: #{downsample_conv.3} parent=5 // pred_check_branch
        %274 = sbr.rel (%p272) target = $region40
      $region39: #{downsample_conv.3} parent=5 // pred_region
        %s275 = ssub.s32 %s12, 2
        // Predicated region
        $region41: #{downsample_conv.3} parent=39 // pred_check
          %p276 = pneg %p109
        $region42: #{downsample_conv.3} parent=39 // pred_check_branch
          %278 = sbr.rel (%p276) target = $region44
        $region43: #{downsample_conv.3} parent=39 // pred_region
          %s279 = sand.u32 %s94, 1
          %s280 = scalar_lea.sflag [#allocation3], %s279
          %s281 = sand.u32 %s94, 1
          %s282 = smul.addr %s281, 64
          %s283 = scalar_lea.vmem [#allocation2], %s282
          %284 = dma.done %s280, 1024
        $region44: #{downsample_conv.3} parent=39 // pred_fallthru
          _
      $region40: #{downsample_conv.3} parent=5 // pred_fallthru
        _
    $region6: #{downsample_conv.3} parent=1 // loop_footer
      %s16 = sadd.s32 1, %s12
    $region7: #{downsample_conv.3} parent=1 // loop_footer_branch
      %11 = sbr.rel target = $region3
    $region8: #{downsample_conv.3} parent=1 // loop_exit
      _
    %285 = vsyncpa [#allocation3], 1
    %s286 = scalar_lea.sflag [#allocation3], 1
    %287 = vsyncpa %s286, 1

// kernel: downsample_conv.2
$region0: #{downsample_conv.2}
  #allocation0 [shape = 'u32[]', space=smem, size = 0x4, offset = 0x4, fixed_abs, tag = 'smem constant byte address 0x4 - core index']
  #allocation1 [shape = 'u32[144,128]{1,0:T(1,128)}', space=vmem, size = 0x12000, scoped, tag = 'internal scratch']
  #allocation2 [shape = 'f32[64,128]{1,0:T(8,128)}', space=vmem, size = 0x8000, scoped, tag = 'scratch operand']
  %s0 = inlined_call_operand.vmem [shape: bf16[128,256], index: 0, kind: input, shape index: {}]
  %s1 = inlined_call_operand.vmem [shape: bf16[256,128], index: 1, kind: input, shape index: {}]
  %s2 = inlined_call_operand.vmem [shape: bf16[128,128], index: 2, kind: output, shape index: {0}]
  %s3 = inlined_call_operand.vmem [shape: f32[2,1,128], index: 3, kind: output, shape index: {1}]
  %s4 = inlined_call_operand.vmem [shape: f32[2,1,128], index: 4, kind: output, shape index: {2}]
  %5 = xla_tuple %s2, %s3, %s4
  %s6 = sld [smem:[#allocation0]]
  $region65: #{downsample_conv.2} parent=0
    _
  %s8 = ssub.s32 1, %s6
  %s9 = scalar_select 0, %s8, %s6
  loop: start=0, step=1, limit=4
  $region2: #{downsample_conv.2} parent=0 // loop_pre_header
    _
  $region3: #{downsample_conv.2} parent=0 // loop_header
    %s11 = sphi 0, %s15
    %p12 = scmp.ge.s32.totalorder %s11, 4
    %s18 = sphi 0, %s37
    %s19 = sphi 0, %s33
    %s20 = sphi 0, %s29
    %s21 = sphi 0, %s18
    %s22 = sphi 0, %s19
    %s23 = sphi 0, %s20
    %s24 = sphi 0, %s21
    %s25 = sphi 0, %s22
    %s26 = sphi 0, %s23
    %s42 = sphi 0, %s44
    %s45 = sphi 0, %s42
    %s46 = sphi 0, %s45
    %s62 = sphi 0, %s46
    %s68 = sphi 0, %s70
    %s71 = sphi 0, %s68
    %s72 = sphi 0, %s71
    %s88 = sphi 0, %s72
    %s96 = sphi 0, %s98
    %s99 = sphi 0, %s96
    %s100 = sphi 0, %s99
    %s116 = sphi 0, %s100
    %s124 = sphi 0, %s126
    %s127 = sphi 0, %s124
    %s128 = sphi 0, %s127
    %s144 = sphi 0, %s128
    %s152 = sphi 0, %s154
    %s155 = sphi 0, %s152
    %s156 = sphi 0, %s155
    %s172 = sphi 0, %s156
  $region4: #{downsample_conv.2} parent=0 // loop_header_branch
    %14 = sbr.rel (%p12) target = $region8
  $region5: #{downsample_conv.2} parent=0 // loop_body
    %s16 = ssub.s32 %s11, 1
    %s17 = ssub.s32 %s11, 2
    %s27 = sadd.s32 1, %s20
    %p28 = scmp.ge.s32.totalorder %s27, 1
    %s29 = scalar_select %p28, 0, %s27
    %s30 = sadd.s32 1, %s19
    %s31 = scalar_select %p28, %s30, %s19
    %p32 = scmp.ge.s32.totalorder %s31, 1
    %s33 = scalar_select %p32, 0, %s31
    %s34 = sadd.s32 1, %s18
    %s35 = scalar_select %p32, %s34, %s18
    %p36 = scmp.ge.s32.totalorder %s35, 2
    %s37 = scalar_select %p36, 0, %s35
    %s38 = ssub.s32 %s18, %s37
    %s39 = ssub.s32 %s20, %s29
    %s40 = sor.u32 %s38, %s39
    %p41 = scmp.eq.s32.totalorder %s40, 0
    %s43 = sadd.s32 %s42, 1
    %s44 = scalar_select %p41, %s42, %s43
    %p47 = pneg %p41
    %p48 = scmp.eq.s32.totalorder %s11, 1
    %p49 = por %p47, %p48
    %p50 = scmp.ne.s32.totalorder %s42, %s45
    %p51 = scmp.eq.s32.totalorder %s11, 0
    %p52 = por %p50, %p51
    %p53 = scmp.ne.s32.totalorder %s42, %s45
    %p54 = scmp.eq.s32.totalorder %s16, 1
    %p55 = por %p53, %p54
    %p56 = scmp.ne.s32.totalorder %s45, %s46
    %p57 = scmp.eq.s32.totalorder %s16, 0
    %p58 = por %p56, %p57
    %p59 = scmp.ne.s32.totalorder %s45, %s46
    %p60 = scmp.eq.s32.totalorder %s17, 1
    %p61 = por %p59, %p60
    %p63 = scmp.ne.s32.totalorder %s46, %s62
    %p64 = scmp.eq.s32.totalorder %s17, 0
    %p65 = por %p63, %p64
    %s66 = ssub.s32 %s19, %s33
    %p67 = scmp.eq.s32.totalorder %s66, 0
    %s69 = sadd.s32 %s68, 1
    %s70 = scalar_select %p67, %s68, %s69
    %p73 = pneg %p67
    %p74 = scmp.eq.s32.totalorder %s11, 1
    %p75 = por %p73, %p74
    %p76 = scmp.ne.s32.totalorder %s68, %s71
    %p77 = scmp.eq.s32.totalorder %s11, 0
    %p78 = por %p76, %p77
    %p79 = scmp.ne.s32.totalorder %s68, %s71
    %p80 = scmp.eq.s32.totalorder %s16, 1
    %p81 = por %p79, %p80
    %p82 = scmp.ne.s32.totalorder %s71, %s72
    %p83 = scmp.eq.s32.totalorder %s16, 0
    %p84 = por %p82, %p83
    %p85 = scmp.ne.s32.totalorder %s71, %s72
    %p86 = scmp.eq.s32.totalorder %s17, 1
    %p87 = por %p85, %p86
    %p89 = scmp.ne.s32.totalorder %s72, %s88
    %p90 = scmp.eq.s32.totalorder %s17, 0
    %p91 = por %p89, %p90
    %s92 = ssub.s32 %s18, %s37
    %s93 = ssub.s32 %s19, %s33
    %s94 = sor.u32 %s92, %s93
    %p95 = scmp.eq.s32.totalorder %s94, 0
    %s97 = sadd.s32 %s96, 1
    %s98 = scalar_select %p95, %s96, %s97
    %p101 = pneg %p95
    %p102 = scmp.eq.s32.totalorder %s11, 1
    %p103 = por %p101, %p102
    %p104 = scmp.ne.s32.totalorder %s96, %s99
    %p105 = scmp.eq.s32.totalorder %s11, 0
    %p106 = por %p104, %p105
    %p107 = scmp.ne.s32.totalorder %s96, %s99
    %p108 = scmp.eq.s32.totalorder %s16, 1
    %p109 = por %p107, %p108
    %p110 = scmp.ne.s32.totalorder %s99, %s100
    %p111 = scmp.eq.s32.totalorder %s16, 0
    %p112 = por %p110, %p111
    %p113 = scmp.ne.s32.totalorder %s99, %s100
    %p114 = scmp.eq.s32.totalorder %s17, 1
    %p115 = por %p113, %p114
    %p117 = scmp.ne.s32.totalorder %s100, %s116
    %p118 = scmp.eq.s32.totalorder %s17, 0
    %p119 = por %p117, %p118
    %s120 = ssub.s32 %s18, %s37
    %s121 = ssub.s32 %s19, %s33
    %s122 = sor.u32 %s120, %s121
    %p123 = scmp.eq.s32.totalorder %s122, 0
    %s125 = sadd.s32 %s124, 1
    %s126 = scalar_select %p123, %s124, %s125
    %p129 = pneg %p123
    %p130 = scmp.eq.s32.totalorder %s11, 1
    %p131 = por %p129, %p130
    %p132 = scmp.ne.s32.totalorder %s124, %s127
    %p133 = scmp.eq.s32.totalorder %s11, 0
    %p134 = por %p132, %p133
    %p135 = scmp.ne.s32.totalorder %s124, %s127
    %p136 = scmp.eq.s32.totalorder %s16, 1
    %p137 = por %p135, %p136
    %p138 = scmp.ne.s32.totalorder %s127, %s128
    %p139 = scmp.eq.s32.totalorder %s16, 0
    %p140 = por %p138, %p139
    %p141 = scmp.ne.s32.totalorder %s127, %s128
    %p142 = scmp.eq.s32.totalorder %s17, 1
    %p143 = por %p141, %p142
    %p145 = scmp.ne.s32.totalorder %s128, %s144
    %p146 = scmp.eq.s32.totalorder %s17, 0
    %p147 = por %p145, %p146
    %s148 = ssub.s32 %s18, %s37
    %s149 = ssub.s32 %s19, %s33
    %s150 = sor.u32 %s148, %s149
    %p151 = scmp.eq.s32.totalorder %s150, 0
    %s153 = sadd.s32 %s152, 1
    %s154 = scalar_select %p151, %s152, %s153
    %p157 = pneg %p151
    %p158 = scmp.eq.s32.totalorder %s11, 1
    %p159 = por %p157, %p158
    %p160 = scmp.ne.s32.totalorder %s152, %s155
    %p161 = scmp.eq.s32.totalorder %s11, 0
    %p162 = por %p160, %p161
    %p163 = scmp.ne.s32.totalorder %s152, %s155
    %p164 = scmp.eq.s32.totalorder %s16, 1
    %p165 = por %p163, %p164
    %p166 = scmp.ne.s32.totalorder %s155, %s156
    %p167 = scmp.eq.s32.totalorder %s16, 0
    %p168 = por %p166, %p167
    %p169 = scmp.ne.s32.totalorder %s155, %s156
    %p170 = scmp.eq.s32.totalorder %s17, 1
    %p171 = por %p169, %p170
    %p173 = scmp.ne.s32.totalorder %s156, %s172
    %p174 = scmp.eq.s32.totalorder %s17, 0
    %p175 = por %p173, %p174
    %p176 = scmp.le.s32.totalorder 1, %s11
    %p177 = scmp.lt.s32.totalorder %s11, 3
    %p178 = pnand %p176, %p177
    %p179 = pneg %p178
    // Predicated region
    $region9: #{downsample_conv.2} parent=5 // pred_check
      _
    $region10: #{downsample_conv.2} parent=5 // pred_check_branch
      %181 = sbr.rel (%p178) target = $region12
    $region11: #{downsample_conv.2} parent=5 // pred_region
      %s182 = ssub.s32 %s11, 1
      // Predicated region
      $region13: #{downsample_conv.2} parent=11 // pred_check
        %p183 = pneg %p84
      $region14: #{downsample_conv.2} parent=11 // pred_check_branch
        %185 = sbr.rel (%p183) target = $region16
      $region15: #{downsample_conv.2} parent=11 // pred_region
        %p186 = scmp.lt.s32.totalorder %s22, 0
        %s187 = scalar_select %p186, %s22, 0
        %s188 = smul.addr %s187, 4
        %s189 = scalar_lea.vmem %s1, %s188
      $region16: #{downsample_conv.2} parent=11 // pred_fallthru
        _
    $region12: #{downsample_conv.2} parent=5 // pred_fallthru
      _
    %p190 = scmp.lt.s32.totalorder %s11, 2
    // Predicated region
    $region17: #{downsample_conv.2} parent=5 // pred_check
      %p191 = pneg %p190
    $region18: #{downsample_conv.2} parent=5 // pred_check_branch
      %193 = sbr.rel (%p191) target = $region20
    $region19: #{downsample_conv.2} parent=5 // pred_region
      // Predicated region
      $region21: #{downsample_conv.2} parent=19 // pred_check
        %p194 = pneg %p52
      $region22: #{downsample_conv.2} parent=19 // pred_check_branch
        %196 = sbr.rel (%p194) target = $region24
      $region23: #{downsample_conv.2} parent=19 // pred_region
        %s197 = smul.u32 8, %s18
        %s198 = smul.u32 2, %s20
        %p199 = scmp.lt.s32.totalorder %s197, 15
        %s200 = scalar_select %p199, %s197, 15
        %p201 = scmp.lt.s32.totalorder %s198, 1
        %s202 = scalar_select %p201, %s198, 1
        %s203 = smul.addr %s200, 2
        %s204 = sadd.s32 %s202, %s203
        %s205 = smul.addr %s204, 4
        %s206 = scalar_lea.vmem %s0, %s205
        %s207 = smul.u32 8, %s18
        %s208 = smul.u32 2, %s20
      $region24: #{downsample_conv.2} parent=19 // pred_fallthru
        _
    $region20: #{downsample_conv.2} parent=5 // pred_fallthru
      _
    %p209 = scmp.le.s32.totalorder 1, %s11
    %p210 = scmp.lt.s32.totalorder %s11, 3
    %p211 = pnand %p209, %p210
    %p212 = pneg %p211
    // Predicated region
    $region25: #{downsample_conv.2} parent=5 // pred_check
      _
    $region26: #{downsample_conv.2} parent=5 // pred_check_branch
      %214 = sbr.rel (%p211) target = $region28
    $region27: #{downsample_conv.2} parent=5 // pred_region
      %s215 = ssub.s32 %s11, 1
      %s216 = smul.u32 8, %s21
      %s217 = smul.u32 2, %s23
      %p218 = scmp.lt.s32.totalorder %s216, 15
      %s219 = scalar_select %p218, %s216, 15
      %p220 = scmp.lt.s32.totalorder %s217, 1
      %s221 = scalar_select %p220, %s217, 1
      %s222 = smul.addr %s219, 2
      %s223 = sadd.s32 %s221, %s222
      %s224 = smul.addr %s223, 4
      %s225 = scalar_lea.vmem %s0, %s224
      %p226 = pneg %p58
      %p227 = pneg %p55
      %p228 = scmp.lt.s32.totalorder %s22, 0
      %s229 = scalar_select %p228, %s22, 0
      %s230 = smul.addr %s229, 4
      %s231 = scalar_lea.vmem %s1, %s230
      %p232 = pneg %p84
      %p233 = pneg %p81
      %p234 = pneg %p112
      %p235 = pneg %p109
      %s236 = smul.u32 8, %s21
      %p237 = scmp.lt.s32.totalorder %s236, 15
      %s238 = scalar_select %p237, %s236, 15
      %p239 = scmp.lt.s32.totalorder %s22, 0
      %s240 = scalar_select %p239, %s22, 0
      %s241 = sadd.s32 %s240, %s238
      %s242 = smul.addr %s241, 4
      %s243 = scalar_lea.vmem %s2, %s242
      %p244 = pneg %p140
      %p245 = pneg %p137
      %p246 = scmp.lt.s32.totalorder %s21, 1
      %s247 = scalar_select %p246, %s21, 1
      %p248 = scmp.lt.s32.totalorder %s22, 0
      %s249 = scalar_select %p248, %s22, 0
      %s250 = sadd.s32 %s249, %s247
      %s251 = scalar_lea.vmem %s3, %s250
      %p252 = pneg %p168
      %p253 = pneg %p165
      %p254 = scmp.lt.s32.totalorder %s21, 1
      %s255 = scalar_select %p254, %s21, 1
      %p256 = scmp.lt.s32.totalorder %s22, 0
      %s257 = scalar_select %p256, %s22, 0
      %s258 = sadd.s32 %s257, %s255
      %s259 = scalar_lea.vmem %s4, %s258
      %s260 = smul.u32 8, %s21
      %s261 = smul.u32 2, %s23
      %p262 = scmp.lt.s32.totalorder %s260, 15
      %s263 = scalar_select %p262, %s260, 15
      %p264 = scmp.lt.s32.totalorder %s261, 1
      %s265 = scalar_select %p264, %s261, 1
      %s266 = smul.addr %s263, 2
      %s267 = sadd.s32 %s265, %s266
      %s268 = smul.addr %s267, 4
      %s269 = scalar_lea.vmem %s0, %s268
      %s270 = smul.u32 8, %s21
      %s271 = smul.u32 2, %s23
      %p272 = scmp.lt.s32.totalorder %s22, 0
      %s273 = scalar_select %p272, %s22, 0
      %s274 = smul.addr %s273, 4
      %s275 = scalar_lea.vmem %s1, %s274
      %s276 = smul.u32 8, %s21
      %p277 = scmp.lt.s32.totalorder %s276, 15
      %s278 = scalar_select %p277, %s276, 15
      %p279 = scmp.lt.s32.totalorder %s22, 0
      %s280 = scalar_select %p279, %s22, 0
      %s281 = sadd.s32 %s280, %s278
      %s282 = smul.addr %s281, 4
      %s283 = scalar_lea.vmem %s2, %s282
      %s284 = smul.u32 8, %s21
      %p285 = scmp.lt.s32.totalorder %s21, 1
      %s286 = scalar_select %p285, %s21, 1
      %p287 = scmp.lt.s32.totalorder %s22, 0
      %s288 = scalar_select %p287, %s22, 0
      %s289 = sadd.s32 %s288, %s286
      %s290 = scalar_lea.vmem %s3, %s289
      %p291 = scmp.lt.s32.totalorder %s21, 1
      %s292 = scalar_select %p291, %s21, 1
      %p293 = scmp.lt.s32.totalorder %s22, 0
      %s294 = scalar_select %p293, %s22, 0
      %s295 = sadd.s32 %s294, %s292
      %s296 = scalar_lea.vmem %s4, %s295
      %p298 = scmp.eq.s32.totalorder %s23, 0
      // Predicated region
      $region29: #{downsample_conv.2} parent=27 // pred_check
        %p299 = pneg %p298
      $region30: #{downsample_conv.2} parent=27 // pred_check_branch
        %301 = sbr.rel (%p299) target = $region32
      $region31: #{downsample_conv.2} parent=27 // pred_region
        %302 = vst [vmem:[#allocation2] sm:$0xff] 0.0
        %303 = vst [vmem:[#allocation2 + $0x8] sm:$0xff] 0.0
        %304 = vst [vmem:[#allocation2 + $0x10] sm:$0xff] 0.0
        %305 = vst [vmem:[#allocation2 + $0x18] sm:$0xff] 0.0
        %306 = vst [vmem:[#allocation2 + $0x20] sm:$0xff] 0.0
        %307 = vst [vmem:[#allocation2 + $0x28] sm:$0xff] 0.0
        %308 = vst [vmem:[#allocation2 + $0x30] sm:$0xff] 0.0
        %309 = vst [vmem:[#allocation2 + $0x38] sm:$0xff] 0.0
      $region32: #{downsample_conv.2} parent=27 // pred_fallthru
        _
      %s310 = smul.u32 %s23, 256
      %s311 = sshra.s32 %s310, 3
      %s312 = sand.u32 %s310, 7
      %s313 = smul.addr %s311, 4
      %s314 = scalar_lea.vmem %s275, %s313
      %v315 = vld [vmem:[%s314] sm:$0xf]
      %v316 = vld [vmem:[%s314 + $0x4] sm:$0xf]
      %v317 = vld [vmem:[%s314 + $0x8] sm:$0xf]
      %v318 = vld [vmem:[%s314 + $0xc] sm:$0xf]
      %v319 = vld [vmem:[%s314 + $0x10] sm:$0xf]
      %v320 = vld [vmem:[%s314 + $0x14] sm:$0xf]
      %v321 = vld [vmem:[%s314 + $0x18] sm:$0xf]
      %v322 = vld [vmem:[%s314 + $0x1c] sm:$0xf]
      %v323 = vld [vmem:[%s314 + $0x20] sm:$0xf]
      %v324 = vld [vmem:[%s314 + $0x24] sm:$0xf]
      %v325 = vld [vmem:[%s314 + $0x28] sm:$0xf]
      %v326 = vld [vmem:[%s314 + $0x2c] sm:$0xf]
      %v327 = vld [vmem:[%s314 + $0x30] sm:$0xf]
      %v328 = vld [vmem:[%s314 + $0x34] sm:$0xf]
      %v329 = vld [vmem:[%s314 + $0x38] sm:$0xf]
      %v330 = vld [vmem:[%s314 + $0x3c] sm:$0xf]
      %v331 = vld [vmem:[%s314 + $0x40] sm:$0xf]
      %v332 = vld [vmem:[%s314 + $0x44] sm:$0xf]
      %v333 = vld [vmem:[%s314 + $0x48] sm:$0xf]
      %v334 = vld [vmem:[%s314 + $0x4c] sm:$0xf]
      %v335 = vld [vmem:[%s314 + $0x50] sm:$0xf]
      %v336 = vld [vmem:[%s314 + $0x54] sm:$0xf]
      %v337 = vld [vmem:[%s314 + $0x58] sm:$0xf]
      %v338 = vld [vmem:[%s314 + $0x5c] sm:$0xf]
      %v339 = vld [vmem:[%s314 + $0x60] sm:$0xf]
      %v340 = vld [vmem:[%s314 + $0x64] sm:$0xf]
      %v341 = vld [vmem:[%s314 + $0x68] sm:$0xf]
      %v342 = vld [vmem:[%s314 + $0x6c] sm:$0xf]
      %v343 = vld [vmem:[%s314 + $0x70] sm:$0xf]
      %v344 = vld [vmem:[%s314 + $0x74] sm:$0xf]
      %v345 = vld [vmem:[%s314 + $0x78] sm:$0xf]
      %v346 = vld [vmem:[%s314 + $0x7c] sm:$0xf]
      %v347 = vld [vmem:[#allocation2] sm:$0xff]
      %v348 = vld [vmem:[#allocation2 + $0x8] sm:$0xff]
      %v349 = vld [vmem:[#allocation2 + $0x10] sm:$0xff]
      %v350 = vld [vmem:[#allocation2 + $0x18] sm:$0xff]
      %v351 = vld [vmem:[#allocation2 + $0x20] sm:$0xff]
      %v352 = vld [vmem:[#allocation2 + $0x28] sm:$0xff]
      %v353 = vld [vmem:[#allocation2 + $0x30] sm:$0xff]
      %v354 = vld [vmem:[#allocation2 + $0x38] sm:$0xff]
      %v355 = vld [vmem:[%s269] sm:$0xff]
      %v356 = vld [vmem:[%s269 + $0x8] sm:$0xff]
      %v357 = vld [vmem:[%s269 + $0x10] sm:$0xff]
      %v358 = vld [vmem:[%s269 + $0x18] sm:$0xff]
      %v359 = vld [vmem:[%s269 + $0x20] sm:$0xff]
      %v360 = vld [vmem:[%s269 + $0x28] sm:$0xff]
      %v361 = vld [vmem:[%s269 + $0x30] sm:$0xff]
      %v362 = vld [vmem:[%s269 + $0x38] sm:$0xff]
      %v371 = vunpack.c.l.b16 %v355
      %v372 = vunpack.c.h.b16 %v355
      %v373 = vunpack.c.l.b16 %v356
      %v374 = vunpack.c.h.b16 %v356
      %v375 = vunpack.c.l.b16 %v357
      %v376 = vunpack.c.h.b16 %v357
      %v377 = vunpack.c.l.b16 %v358
      %v378 = vunpack.c.h.b16 %v358
      %v379 = vunpack.c.l.b16 %v359
      %v380 = vunpack.c.h.b16 %v359
      %v381 = vunpack.c.l.b16 %v360
      %v382 = vunpack.c.h.b16 %v360
      %v383 = vunpack.c.l.b16 %v361
      %v384 = vunpack.c.h.b16 %v361
      %v385 = vunpack.c.l.b16 %v362
      %v386 = vunpack.c.h.b16 %v362
      %v387 = vpack.c.b16 %v373, %v371
      %v388 = vpack.c.b16 %v374, %v372
      %v389 = vpack.c.b16 %v377, %v375
      %v390 = vpack.c.b16 %v378, %v376
      %v391 = vpack.c.b16 %v381, %v379
      %v392 = vpack.c.b16 %v382, %v380
      %v393 = vpack.c.b16 %v385, %v383
      %v394 = vpack.c.b16 %v386, %v384
      %v435 = vunpack.c.l.b16 %v315
      %v436 = vunpack.c.l.b16 %v316
      %v437 = vunpack.c.l.b16 %v317
      %v438 = vunpack.c.l.b16 %v318
      %v439 = vunpack.c.l.b16 %v319
      %v440 = vunpack.c.l.b16 %v320
      %v441 = vunpack.c.l.b16 %v321
      %v442 = vunpack.c.l.b16 %v322
      %v443 = vunpack.c.l.b16 %v323
      %v444 = vunpack.c.l.b16 %v324
      %v445 = vunpack.c.l.b16 %v325
      %v446 = vunpack.c.l.b16 %v326
      %v447 = vunpack.c.l.b16 %v327
      %v448 = vunpack.c.l.b16 %v328
      %v449 = vunpack.c.l.b16 %v329
      %v450 = vunpack.c.l.b16 %v330
      %v451 = vunpack.c.l.b16 %v331
      %v452 = vunpack.c.l.b16 %v332
      %v453 = vunpack.c.l.b16 %v333
      %v454 = vunpack.c.l.b16 %v334
      %v455 = vunpack.c.l.b16 %v335
      %v456 = vunpack.c.l.b16 %v336
      %v457 = vunpack.c.l.b16 %v337
      %v458 = vunpack.c.l.b16 %v338
      %v459 = vunpack.c.l.b16 %v339
      %v460 = vunpack.c.l.b16 %v340
      %v461 = vunpack.c.l.b16 %v341
      %v462 = vunpack.c.l.b16 %v342
      %v463 = vunpack.c.l.b16 %v343
      %v464 = vunpack.c.l.b16 %v344
      %v465 = vunpack.c.l.b16 %v345
      %v466 = vunpack.c.l.b16 %v346
      %v467 = vpack.c.b16 %v436, %v435
      %v468 = vpack.c.b16 %v438, %v437
      %v469 = vpack.c.b16 %v440, %v439
      %v470 = vpack.c.b16 %v442, %v441
      %v471 = vpack.c.b16 %v444, %v443
      %v472 = vpack.c.b16 %v446, %v445
      %v473 = vpack.c.b16 %v448, %v447
      %v474 = vpack.c.b16 %v450, %v449
      %v475 = vpack.c.b16 %v452, %v451
      %v476 = vpack.c.b16 %v454, %v453
      %v477 = vpack.c.b16 %v456, %v455
      %v478 = vpack.c.b16 %v458, %v457
      %v479 = vpack.c.b16 %v460, %v459
      %v480 = vpack.c.b16 %v462, %v461
      %v481 = vpack.c.b16 %v464, %v463
      %v482 = vpack.c.b16 %v466, %v465
      %499 = vmatprep.subr.bf16.mxu0 0
      %500 = vmatpush1.bf16.msra.mxu0 %v467
      %501 = vmatprep.subr.bf16.mxu0 0
      %502 = vmatpush1.bf16.msra.mxu0 %v468
      %503 = vmatprep.subr.bf16.mxu0 0
      %504 = vmatpush1.bf16.msra.mxu0 %v469
      %505 = vmatprep.subr.bf16.mxu0 0
      %506 = vmatpush1.bf16.msra.mxu0 %v470
      %507 = vmatprep.subr.bf16.mxu0 0
      %508 = vmatpush1.bf16.msra.mxu0 %v471
      %509 = vmatprep.subr.bf16.mxu0 0
      %510 = vmatpush1.bf16.msra.mxu0 %v472
      %511 = vmatprep.subr.bf16.mxu0 0
      %512 = vmatpush1.bf16.msra.mxu0 %v473
      %513 = vmatprep.subr.bf16.mxu0 0
      %514 = vmatpush1.bf16.msra.mxu0 %v474
      %515 = vmatprep.subr.bf16.mxu0 0
      %516 = vmatpush1.bf16.msra.mxu0 %v475
      %517 = vmatprep.subr.bf16.mxu0 0
      %518 = vmatpush1.bf16.msra.mxu0 %v476
      %519 = vmatprep.subr.bf16.mxu0 0
      %520 = vmatpush1.bf16.msra.mxu0 %v477
      %521 = vmatprep.subr.bf16.mxu0 0
      %522 = vmatpush1.bf16.msra.mxu0 %v478
      %523 = vmatprep.subr.bf16.mxu0 0
      %524 = vmatpush1.bf16.msra.mxu0 %v479
      %525 = vmatprep.subr.bf16.mxu0 0
      %526 = vmatpush1.bf16.msra.mxu0 %v480
      %527 = vmatprep.subr.bf16.mxu0 0
      %528 = vmatpush1.bf16.msra.mxu0 %v481
      %529 = vmatprep.subr.bf16.mxu0 0
      %530 = vmatpush1.bf16.msra.mxu0 %v482
      %531 = vmatprep.mubr.bf16.mxu0 %v388
      %532 = vmatmul.mubr.bf16.gmra.mrb[0].mxu0 %v387
      %v533 = vpop.f32.mrb[0].mxu0
      %v534 = vadd.f32 0.0, %v533
      %v535 = vpop.f32.mrb[0].mxu0
      %v536 = vpop.f32.mrb[0].mxu0
      %v537 = vadd.f32 0.0, %v536
      %v538 = vpop.f32.mrb[0].mxu0
      %539 = vmatprep.mubr.bf16.mxu0 %v390
      %540 = vmatmul.mubr.bf16.gmra.mrb[0].mxu0 %v389
      %v541 = vpop.f32.mrb[0].mxu0
      %v542 = vadd.f32 0.0, %v541
      %v543 = vpop.f32.mrb[0].mxu0
      %v544 = vpop.f32.mrb[0].mxu0
      %v545 = vadd.f32 0.0, %v544
      %v546 = vpop.f32.mrb[0].mxu0
      %547 = vmatprep.mubr.bf16.mxu0 %v392
      %548 = vmatmul.mubr.bf16.gmra.mrb[0].mxu0 %v391
      %v549 = vpop.f32.mrb[0].mxu0
      %v550 = vadd.f32 0.0, %v549
      %v551 = vpop.f32.mrb[0].mxu0
      %v552 = vpop.f32.mrb[0].mxu0
      %v553 = vadd.f32 0.0, %v552
      %v554 = vpop.f32.mrb[0].mxu0
      %555 = vmatprep.mubr.bf16.mxu0 %v394
      %556 = vmatmul.mubr.bf16.gmra.mrb[0].mxu0 %v393
      %v557 = vpop.f32.mrb[0].mxu0
      %v558 = vadd.f32 0.0, %v557
      %v559 = vpop.f32.mrb[0].mxu0
      %v560 = vpop.f32.mrb[0].mxu0
      %v561 = vadd.f32 0.0, %v560
      %v562 = vpop.f32.mrb[0].mxu0
      %563 = vdwg.mxu0
      %v564 = vadd.f32 %v347, %v534
      %v565 = vadd.f32 %v348, %v537
      %v566 = vadd.f32 %v349, %v542
      %v567 = vadd.f32 %v350, %v545
      %v568 = vadd.f32 %v351, %v550
      %v569 = vadd.f32 %v352, %v553
      %v570 = vadd.f32 %v353, %v558
      %v571 = vadd.f32 %v354, %v561
      %572 = vst [vmem:[#allocation2] sm:$0xff] %v564
      %573 = vst [vmem:[#allocation2 + $0x8] sm:$0xff] %v565
      %574 = vst [vmem:[#allocation2 + $0x10] sm:$0xff] %v566
      %575 = vst [vmem:[#allocation2 + $0x18] sm:$0xff] %v567
      %576 = vst [vmem:[#allocation2 + $0x20] sm:$0xff] %v568
      %577 = vst [vmem:[#allocation2 + $0x28] sm:$0xff] %v569
      %578 = vst [vmem:[#allocation2 + $0x30] sm:$0xff] %v570
      %579 = vst [vmem:[#allocation2 + $0x38] sm:$0xff] %v571
      // Predicated region
      $region33: #{downsample_conv.2} parent=27 // pred_check
        %p580 = pneg %p298
      $region34: #{downsample_conv.2} parent=27 // pred_check_branch
        %582 = sbr.rel (%p580) target = $region36
      $region35: #{downsample_conv.2} parent=27 // pred_region
        %v583 = vld [vmem:[#allocation2] sm:$0xff]
        %v584 = vld [vmem:[#allocation2 + $0x8] sm:$0xff]
        %v585 = vld [vmem:[#allocation2 + $0x10] sm:$0xff]
        %v586 = vld [vmem:[#allocation2 + $0x18] sm:$0xff]
        %v587 = vld [vmem:[#allocation2 + $0x20] sm:$0xff]
        %v588 = vld [vmem:[#allocation2 + $0x28] sm:$0xff]
        %v589 = vld [vmem:[#allocation2 + $0x30] sm:$0xff]
        %v590 = vld [vmem:[#allocation2 + $0x38] sm:$0xff]
        %v591 = vpack.c.bf16 %v584, %v583
        %v592 = vpack.c.bf16 %v586, %v585
        %v593 = vpack.c.bf16 %v588, %v587
        %v594 = vpack.c.bf16 %v590, %v589
        %v599 = vunpack.c.l.b16 %v591
        %v600 = vunpack.c.h.b16 %v591
        %v601 = vunpack.c.l.b16 %v592
        %v602 = vunpack.c.h.b16 %v592
        %v603 = vunpack.c.l.b16 %v593
        %v604 = vunpack.c.h.b16 %v593
        %v605 = vunpack.c.l.b16 %v594
        %v606 = vunpack.c.h.b16 %v594
        %v607 = vpack.c.b16 %v599, %v599
        %v608 = vpack.c.b16 %v600, %v600
        %v609 = vpack.c.b16 %v601, %v601
        %v610 = vpack.c.b16 %v602, %v602
        %v611 = vpack.c.b16 %v603, %v603
        %v612 = vpack.c.b16 %v604, %v604
        %v613 = vpack.c.b16 %v605, %v605
        %v614 = vpack.c.b16 %v606, %v606
        %623 = vst [vmem:[%s283] sm:$0xf] %v607
        %624 = vst [vmem:[%s283 + $0x4] sm:$0xf] %v608
        %625 = vst [vmem:[%s283 + $0x8] sm:$0xf] %v609
        %626 = vst [vmem:[%s283 + $0xc] sm:$0xf] %v610
        %627 = vst [vmem:[%s283 + $0x10] sm:$0xf] %v611
        %628 = vst [vmem:[%s283 + $0x14] sm:$0xf] %v612
        %629 = vst [vmem:[%s283 + $0x18] sm:$0xf] %v613
        %630 = vst [vmem:[%s283 + $0x1c] sm:$0xf] %v614
        %v631 = vadd.f32 %v583, %v584
        %v632 = vadd.f32 %v631, %v585
        %v633 = vadd.f32 %v632, %v586
        %v634 = vadd.f32 %v633, %v587
        %v635 = vadd.f32 %v634, %v588
        %v636 = vadd.f32 %v635, %v589
        %v637 = vadd.f32 %v636, %v590
        %v638 = vrot.slane %v637, 4
        %v639 = vadd.f32 %v637, %v638
        %v640 = vrot.slane %v639, 2
        %v641 = vadd.f32 %v639, %v640
        %v642 = vrot.slane %v641, 1
        %v643 = vadd.f32 %v641, %v642
        %644 = vst [vmem:[%s290] sm:$0x1] %v643
        %v645 = vmul.f32 %v583, %v583
        %v646 = vmul.f32 %v584, %v584
        %v647 = vmul.f32 %v585, %v585
        %v648 = vmul.f32 %v586, %v586
        %v649 = vmul.f32 %v587, %v587
        %v650 = vmul.f32 %v588, %v588
        %v651 = vmul.f32 %v589, %v589
        %v652 = vmul.f32 %v590, %v590
        %v653 = vadd.f32 %v645, %v646
        %v654 = vadd.f32 %v653, %v647
        %v655 = vadd.f32 %v654, %v648
        %v656 = vadd.f32 %v655, %v649
        %v657 = vadd.f32 %v656, %v650
        %v658 = vadd.f32 %v657, %v651
        %v659 = vadd.f32 %v658, %v652
        %v660 = vrot.slane %v659, 4
        %v661 = vadd.f32 %v659, %v660
        %v662 = vrot.slane %v661, 2
        %v663 = vadd.f32 %v661, %v662
        %v664 = vrot.slane %v663, 1
        %v665 = vadd.f32 %v663, %v664
        %666 = vst [vmem:[%s296] sm:$0x1] %v665
      $region36: #{downsample_conv.2} parent=27 // pred_fallthru
        _
      %s667 = smul.u32 8, %s21
      %p668 = scmp.lt.s32.totalorder %s667, 15
      %s669 = scalar_select %p668, %s667, 15
      %p670 = scmp.lt.s32.totalorder %s22, 0
      %s671 = scalar_select %p670, %s22, 0
      %s672 = sadd.s32 %s671, %s669
      %s673 = smul.addr %s672, 4
      %s674 = scalar_lea.vmem %s2, %s673
      %p675 = scmp.lt.s32.totalorder %s21, 1
      %s676 = scalar_select %p675, %s21, 1
      %p677 = scmp.lt.s32.totalorder %s22, 0
      %s678 = scalar_select %p677, %s22, 0
      %s679 = sadd.s32 %s678, %s676
      %s680 = scalar_lea.vmem %s3, %s679
      %p681 = scmp.lt.s32.totalorder %s21, 1
      %s682 = scalar_select %p681, %s21, 1
      %p683 = scmp.lt.s32.totalorder %s22, 0
      %s684 = scalar_select %p683, %s22, 0
      %s685 = sadd.s32 %s684, %s682
      %s686 = scalar_lea.vmem %s4, %s685
      // Predicated region
      $region37: #{downsample_conv.2} parent=27 // pred_check
        %p687 = pneg %p109
      $region38: #{downsample_conv.2} parent=27 // pred_check_branch
        %689 = sbr.rel (%p687) target = $region40
      $region39: #{downsample_conv.2} parent=27 // pred_region
        %s690 = smul.u32 8, %s21
      $region40: #{downsample_conv.2} parent=27 // pred_fallthru
        _
      // Predicated region
      $region41: #{downsample_conv.2} parent=27 // pred_check
        %p691 = pneg %p137
      $region42: #{downsample_conv.2} parent=27 // pred_check_branch
        %693 = sbr.rel (%p691) target = $region44
      $region43: #{downsample_conv.2} parent=27 // pred_region
        _
      $region44: #{downsample_conv.2} parent=27 // pred_fallthru
        _
      // Predicated region
      $region45: #{downsample_conv.2} parent=27 // pred_check
        %p694 = pneg %p165
      $region46: #{downsample_conv.2} parent=27 // pred_check_branch
        %696 = sbr.rel (%p694) target = $region48
      $region47: #{downsample_conv.2} parent=27 // pred_region
        _
      $region48: #{downsample_conv.2} parent=27 // pred_fallthru
        _
    $region28: #{downsample_conv.2} parent=5 // pred_fallthru
      _
    %p697 = scmp.le.s32.totalorder 2, %s11
    // Predicated region
    $region49: #{downsample_conv.2} parent=5 // pred_check
      %p698 = pneg %p697
    $region50: #{downsample_conv.2} parent=5 // pred_check_branch
      %700 = sbr.rel (%p698) target = $region52
    $region51: #{downsample_conv.2} parent=5 // pred_region
      %s701 = ssub.s32 %s11, 2
      // Predicated region
      $region53: #{downsample_conv.2} parent=51 // pred_check
        %p702 = pneg %p115
      $region54: #{downsample_conv.2} parent=51 // pred_check_branch
        %704 = sbr.rel (%p702) target = $region56
      $region55: #{downsample_conv.2} parent=51 // pred_region
        %s705 = smul.u32 8, %s24
        %p706 = scmp.lt.s32.totalorder %s705, 15
        %s707 = scalar_select %p706, %s705, 15
        %p708 = scmp.lt.s32.totalorder %s25, 0
        %s709 = scalar_select %p708, %s25, 0
        %s710 = sadd.s32 %s709, %s707
        %s711 = smul.addr %s710, 4
        %s712 = scalar_lea.vmem %s2, %s711
      $region56: #{downsample_conv.2} parent=51 // pred_fallthru
        _
      // Predicated region
      $region57: #{downsample_conv.2} parent=51 // pred_check
        %p713 = pneg %p143
      $region58: #{downsample_conv.2} parent=51 // pred_check_branch
        %715 = sbr.rel (%p713) target = $region60
      $region59: #{downsample_conv.2} parent=51 // pred_region
        %p716 = scmp.lt.s32.totalorder %s24, 1
        %s717 = scalar_select %p716, %s24, 1
        %p718 = scmp.lt.s32.totalorder %s25, 0
        %s719 = scalar_select %p718, %s25, 0
        %s720 = sadd.s32 %s719, %s717
        %s721 = scalar_lea.vmem %s3, %s720
      $region60: #{downsample_conv.2} parent=51 // pred_fallthru
        _
      // Predicated region
      $region61: #{downsample_conv.2} parent=51 // pred_check
        %p722 = pneg %p171
      $region62: #{downsample_conv.2} parent=51 // pred_check_branch
        %724 = sbr.rel (%p722) target = $region64
      $region63: #{downsample_conv.2} parent=51 // pred_region
        %p725 = scmp.lt.s32.totalorder %s24, 1
        %s726 = scalar_select %p725, %s24, 1
        %p727 = scmp.lt.s32.totalorder %s25, 0
        %s728 = scalar_select %p727, %s25, 0
        %s729 = sadd.s32 %s728, %s726
        %s730 = scalar_lea.vmem %s4, %s729
      $region64: #{downsample_conv.2} parent=51 // pred_fallthru
        _
    $region52: #{downsample_conv.2} parent=5 // pred_fallthru
      _
  $region6: #{downsample_conv.2} parent=0 // loop_footer
    %s15 = sadd.s32 1, %s11
  $region7: #{downsample_conv.2} parent=0 // loop_footer_branch
    %10 = sbr.rel target = $region3
  $region8: #{downsample_conv.2} parent=0 // loop_exit
    _

</llo_original>
